<compile_context>
chip_gen: v7x
topology: tpu7x:2x2x1
jax: 0.10.0
libtpu: 0.0.40
codegen_flags: <defaults>
</compile_context>

<pallas_src>
import functools

import jax
import jax.numpy as jnp
from jax.experimental import pallas as pl
from jax.experimental.pallas import tpu as pltpu

EPS = 1e-5


def _round_up(x, m):
    return (x + m - 1) // m * m


# ---------------------------------------------------------------------------
# Kernels
# ---------------------------------------------------------------------------
def _fused_kernel(h_ref, w1_ref, g1_ref, be1_ref, w2_ref, g2_ref, be2_ref,
                  o_ref, *, n_rows):
    """Fast path: whole graph in one VMEM block. Both matmuls + global BNs + ReLUs."""
    inv_n = 1.0 / n_rows
    # Biases dropped: a per-feature constant is cancelled by BN mean subtraction.
    z = jnp.dot(h_ref[...], w1_ref[...], preferred_element_type=jnp.float32)
    mu1 = jnp.sum(z, axis=0, keepdims=True) * inv_n
    var1 = jnp.maximum(jnp.sum(z * z, axis=0, keepdims=True) * inv_n - mu1 * mu1, 0.0)
    s1 = g1_ref[...].astype(jnp.float32) * jax.lax.rsqrt(var1 + EPS)
    a = jnp.maximum((z - mu1) * s1 + be1_ref[...].astype(jnp.float32), 0.0)
    # Zero padded rows so they do not pollute layer-2 batch statistics.
    rows = jax.lax.broadcasted_iota(jnp.int32, (a.shape[0], 1), 0)
    a = jnp.where(rows < n_rows, a, 0.0)
    y = jnp.dot(a.astype(w2_ref.dtype), w2_ref[...], preferred_element_type=jnp.float32)
    mu2 = jnp.sum(y, axis=0, keepdims=True) * inv_n
    var2 = jnp.maximum(jnp.sum(y * y, axis=0, keepdims=True) * inv_n - mu2 * mu2, 0.0)
    s2 = g2_ref[...].astype(jnp.float32) * jax.lax.rsqrt(var2 + EPS)
    o_ref[...] = jnp.maximum((y - mu2) * s2 + be2_ref[...].astype(jnp.float32),
                             0.0).astype(o_ref.dtype)


def _lin1_stats_kernel(h_ref, w1_ref, z_ref, st_ref):
    """Pass 1 (parallel over N tiles): z = h @ w1; per-tile partial column stats."""
    z = jnp.dot(h_ref[...], w1_ref[...], preferred_element_type=jnp.float32)
    z_ref[...] = z.astype(z_ref.dtype)
    col_sum = jnp.sum(z, axis=0, keepdims=True)
    col_ssq = jnp.sum(z * z, axis=0, keepdims=True)
    # (8, hid_p) lane-dense partial-stats block: row 0 = sum, row 1 = sum of squares.
    st_ref[...] = jnp.concatenate(
        [col_sum, col_ssq, jnp.zeros((6, z.shape[1]), jnp.float32)], axis=0)


def _bn1_lin2_stats_kernel(z_ref, s1_ref, t1_ref, w2_ref, st_ref, *, n_rows, tile_n):
    """Pass 2 (parallel): a = relu(z*s1+t1); y = a @ w2; emit per-tile layer-2 stats only."""
    a = jnp.maximum(z_ref[...] * s1_ref[...] + t1_ref[...], 0.0)
    # Mask padded rows (only relevant for the last tile) so stats stay exact.
    rows = (pl.program_id(0) * tile_n
            + jax.lax.broadcasted_iota(jnp.int32, (tile_n, 1), 0))
    a = jnp.where(rows < n_rows, a, 0.0)
    y = jnp.dot(a.astype(w2_ref.dtype), w2_ref[...], preferred_element_type=jnp.float32)
    col_sum = jnp.sum(y, axis=0, keepdims=True)
    col_ssq = jnp.sum(y * y, axis=0, keepdims=True)
    st_ref[...] = jnp.concatenate(
        [col_sum, col_ssq, jnp.zeros((6, y.shape[1]), jnp.float32)], axis=0)


def _bn2_out_kernel(z_ref, s1_ref, t1_ref, w2_ref, s2_ref, t2_ref, o_ref):
    """Pass 3 (parallel): recompute y from z, apply BN2 affine + ReLU, store output."""
    a = jnp.maximum(z_ref[...] * s1_ref[...] + t1_ref[...], 0.0)
    y = jnp.dot(a.astype(w2_ref.dtype), w2_ref[...], preferred_element_type=jnp.float32)
    o_ref[...] = jnp.maximum(y * s2_ref[...] + t2_ref[...], 0.0).astype(o_ref.dtype)


# ---------------------------------------------------------------------------
# Wrapper
# ---------------------------------------------------------------------------
def apply_node_func(h, params, *, tile_n=None, allow_fused=True):
    """ApplyNodeFunc forward: MLP(Linear->BN->ReLU->Linear) -> BN -> ReLU.

    Feature dims are zero-padded to lane multiples (128). Small graphs take a
    single-block fused path (guarded by a VMEM-footprint check); larger graphs
    stream the node axis through three fully-parallel tiled passes with global
    BatchNorm statistics reduced from per-tile partials in plain JAX.
    """
    w1, b1, g1, be1, w2, b2, g2, be2 = params
    del b1, b2  # exactly cancelled by the training-mode BN mean subtraction

    n, din = h.shape
    hid = w1.shape[1]
    dout = w2.shape[1]

    din_p = _round_up(din, 128)
    hid_p = _round_up(hid, 128)
    dout_p = _round_up(dout, 128)

    try:
        vmem_cap = int(pltpu.get_tpu_info().vmem_capacity_bytes)
    except Exception:
        vmem_cap = 64 * 1024 * 1024  # conservative (v7x per-TC)

    # Lane-padded weights / BN params (shared by both paths).
    w1p = jnp.pad(w1, ((0, din_p - din), (0, hid_p - hid)))
    g1p = jnp.pad(g1, ((0, 0), (0, hid_p - hid)))
    be1p = jnp.pad(be1, ((0, 0), (0, hid_p - hid)))
    w2p = jnp.pad(w2, ((0, hid_p - hid), (0, dout_p - dout)))
    g2p = jnp.pad(g2, ((0, 0), (0, dout_p - dout)))
    be2p = jnp.pad(be2, ((0, 0), (0, dout_p - dout)))

    # ---- single-block fused fast path, guarded by VMEM footprint ----
    n8 = _round_up(n, 8)
    fused_bytes = 4 * (n8 * (din_p + 2 * hid_p + 2 * dout_p)
                       + din_p * hid_p + hid_p * dout_p) + (1 << 20)
    if allow_fused and fused_bytes <= int(0.35 * vmem_cap):
        hp = jnp.pad(h, ((0, n8 - n), (0, din_p - din)))
        full = lambda a: pl.BlockSpec(a.shape, lambda: (0,) * a.ndim)
        out = pl.pallas_call(
            functools.partial(_fused_kernel, n_rows=n),
            out_shape=jax.ShapeDtypeStruct((n8, dout_p), h.dtype),
            grid=(),
            in_specs=[full(hp), full(w1p), full(g1p), full(be1p),
                      full(w2p), full(g2p), full(be2p)],
            out_specs=pl.BlockSpec((n8, dout_p), lambda: (0, 0)),
            compiler_params=pltpu.CompilerParams(
                vmem_limit_bytes=int(min(0.7 * vmem_cap, 96 << 20))),
            cost_estimate=pl.CostEstimate(
                flops=2 * n8 * (din_p * hid_p + hid_p * dout_p),
                transcendentals=0,
                bytes_accessed=4 * (n8 * din_p + din_p * hid_p
                                    + hid_p * dout_p + n8 * dout_p)),
        )(hp, w1p, g1p, be1p, w2p, g2p, be2p)
        return out[:n, :dout]

    # ---- tiled 3-pass path ----
    weight_bytes = 8 * max(din_p * hid_p, hid_p * dout_p)     # double-buffered weights
    per_row_bytes = 8 * max(din_p + hid_p, hid_p + dout_p)    # f32, double-buffered
    if tile_n is None:
        stream_budget = max(int(0.40 * vmem_cap) - weight_bytes, 2 << 20)
        tile = max(256, min(stream_budget // per_row_bytes, 1024))
    else:
        tile = max(8, tile_n)
    tile = _round_up(min(tile, max(n, 8)), 8)
    n_p = _round_up(n, tile)
    n_tiles = n_p // tile

    need = tile * per_row_bytes + weight_bytes + (4 << 20)
    tiled_limit = int(min(max(need, 32 << 20), int(0.9 * vmem_cap)))
    cp_parallel = pltpu.CompilerParams(
        dimension_semantics=("parallel",), vmem_limit_bytes=tiled_limit)

    hp = jnp.pad(h, ((0, n_p - n), (0, din_p - din)))

    # Pass 1: z = h @ w1 per node tile + per-tile partial layer-1 statistics.
    z, st1 = pl.pallas_call(
        _lin1_stats_kernel,
        out_shape=(jax.ShapeDtypeStruct((n_p, hid_p), jnp.float32),
                   jax.ShapeDtypeStruct((8 * n_tiles, hid_p), jnp.float32)),
        grid=(n_tiles,),
        in_specs=[pl.BlockSpec((tile, din_p), lambda i: (i, 0)),
                  pl.BlockSpec((din_p, hid_p), lambda i: (0, 0))],
        out_specs=(pl.BlockSpec((tile, hid_p), lambda i: (i, 0)),
                   pl.BlockSpec((8, hid_p), lambda i: (i, 0))),
        compiler_params=cp_parallel,
        cost_estimate=pl.CostEstimate(
            flops=2 * n_p * din_p * hid_p, transcendentals=0,
            bytes_accessed=4 * (n_p * din_p + din_p * hid_p + n_p * hid_p
                                + 8 * n_tiles * hid_p)),
    )(hp, w1p)

    # Reduce partials + fold layer-1 BN into affine (tiny (1,128)-scale JAX work).
    acc1 = st1.reshape(n_tiles, 8, hid_p).sum(axis=0)
    mu1 = acc1[0] / n
    var1 = jnp.maximum(acc1[1] / n - mu1 * mu1, 0.0)
    s1 = g1p * jax.lax.rsqrt(var1 + EPS)
    t1 = be1p - mu1 * s1

    # Pass 2: BN1(affine)+ReLU, y = a @ w2, emit ONLY per-tile layer-2 stats
    # (y itself is never written to HBM; it is recomputed from z in pass 3).
    st2 = pl.pallas_call(
        functools.partial(_bn1_lin2_stats_kernel, n_rows=n, tile_n=tile),
        out_shape=jax.ShapeDtypeStruct((8 * n_tiles, dout_p), jnp.float32),
        grid=(n_tiles,),
        in_specs=[pl.BlockSpec((tile, hid_p), lambda i: (i, 0)),
                  pl.BlockSpec((1, hid_p), lambda i: (0, 0)),
                  pl.BlockSpec((1, hid_p), lambda i: (0, 0)),
                  pl.BlockSpec((hid_p, dout_p), lambda i: (0, 0))],
        out_specs=pl.BlockSpec((8, dout_p), lambda i: (i, 0)),
        compiler_params=cp_parallel,
        cost_estimate=pl.CostEstimate(
            flops=2 * n_p * hid_p * dout_p, transcendentals=0,
            bytes_accessed=4 * (n_p * hid_p + hid_p * dout_p
                                + 8 * n_tiles * dout_p)),
    )(z, s1, t1, w2p)

    acc2 = st2.reshape(n_tiles, 8, dout_p).sum(axis=0)
    mu2 = acc2[0] / n
    var2 = jnp.maximum(acc2[1] / n - mu2 * mu2, 0.0)
    s2 = g2p * jax.lax.rsqrt(var2 + EPS)
    t2 = be2p - mu2 * s2

    # Pass 3: recompute y from z (MXU has huge slack on the HBM roofline) and
    # apply BN2(affine)+ReLU. Padded rows are garbage but sliced off below.
    out = pl.pallas_call(
        _bn2_out_kernel,
        out_shape=jax.ShapeDtypeStruct((n_p, dout_p), h.dtype),
        grid=(n_tiles,),
        in_specs=[pl.BlockSpec((tile, hid_p), lambda i: (i, 0)),
                  pl.BlockSpec((1, hid_p), lambda i: (0, 0)),
                  pl.BlockSpec((1, hid_p), lambda i: (0, 0)),
                  pl.BlockSpec((hid_p, dout_p), lambda i: (0, 0)),
                  pl.BlockSpec((1, dout_p), lambda i: (0, 0)),
                  pl.BlockSpec((1, dout_p), lambda i: (0, 0))],
        out_specs=pl.BlockSpec((tile, dout_p), lambda i: (i, 0)),
        compiler_params=cp_parallel,
        cost_estimate=pl.CostEstimate(
            flops=2 * n_p * hid_p * dout_p, transcendentals=0,
            bytes_accessed=4 * (n_p * hid_p + hid_p * dout_p + n_p * dout_p)),
    )(z, s1, t1, w2p, s2, t2)

    return out[:n, :dout]


# ---------------------------------------------------------------------------
# Params / reference
# ---------------------------------------------------------------------------
def init_params(key, in_dim, hidden_dim, out_dim):
    k1, k2, k3, k4 = jax.random.split(key, 4)
    # PyTorch Linear default init: U(-1/sqrt(fan_in), 1/sqrt(fan_in))
    lim1 = 1.0 / jnp.sqrt(in_dim)
    lim2 = 1.0 / jnp.sqrt(hidden_dim)
    w1 = jax.random.uniform(k1, (in_dim, hidden_dim), jnp.float32, -lim1, lim1)
    b1 = jax.random.uniform(k2, (1, hidden_dim), jnp.float32, -lim1, lim1)
    w2 = jax.random.uniform(k3, (hidden_dim, out_dim), jnp.float32, -lim2, lim2)
    b2 = jax.random.uniform(k4, (1, out_dim), jnp.float32, -lim2, lim2)
    # BatchNorm1d default init: weight=1, bias=0
    g1 = jnp.ones((1, hidden_dim), jnp.float32)
    be1 = jnp.zeros((1, hidden_dim), jnp.float32)
    g2 = jnp.ones((1, out_dim), jnp.float32)
    be2 = jnp.zeros((1, out_dim), jnp.float32)
    return (w1, b1, g1, be1, w2, b2, g2, be2)


def reference(h, params):
    # Pure-JAX reference including the linear biases (kernel drops them; the BN
    # mean subtraction cancels them exactly in training mode).
    (w1, b1, g1, be1, w2, b2, g2, be2) = params
    z = h @ w1 + b1
    mu = z.mean(0, keepdims=True)
    var = ((z - mu) ** 2).mean(0, keepdims=True)
    z = jnp.maximum((z - mu) / jnp.sqrt(var + EPS) * g1 + be1, 0.0)
    y = z @ w2 + b2
    mu2 = y.mean(0, keepdims=True)
    var2 = ((y - mu2) ** 2).mean(0, keepdims=True)
    y = (y - mu2) / jnp.sqrt(var2 + EPS) * g2 + be2
    return jnp.maximum(y, 0.0)


if __name__ == "__main__":
    key = jax.random.PRNGKey(0)
    k_h1, k_p1, k_h2, k_p2 = jax.random.split(key, 4)

    # Case A: small GIN-default shapes -> single-block fused fast path.
    N1, din1, hid1, dout1 = 16, 32, 32, 32
    h1 = jax.random.normal(k_h1, (N1, din1), jnp.float32)
    params1 = init_params(k_p1, din1, hid1, dout1)
    out1 = jax.block_until_ready(apply_node_func(h1, params1))
    ref1 = reference(h1, params1)
    assert out1.shape == ref1.shape
    assert jnp.allclose(out1, ref1, atol=1e-4, rtol=1e-4), \
        float(jnp.max(jnp.abs(out1 - ref1)))

    # Case B: non-aligned shapes, force the tiled 3-pass path (3 node tiles,
    # padding + row masking + per-tile partial stats reduced in JAX).
    N2, din2, hid2, dout2 = 300, 48, 96, 80
    h2 = jax.random.normal(k_h2, (N2, din2), jnp.float32)
    params2 = init_params(k_p2, din2, hid2, dout2)
    out2 = jax.block_until_ready(
        apply_node_func(h2, params2, tile_n=128, allow_fused=False))
    ref2 = reference(h2, params2)
    assert out2.shape == ref2.shape
    assert jnp.allclose(out2, ref2, atol=1e-4, rtol=1e-4), \
        float(jnp.max(jnp.abs(out2 - ref2)))

    print("KERNEL_OK")
</pallas_src>

<mosaic_0001>
module attributes {stable_mosaic.version = 11 : i64} {
  func.func @_fused_kernel(%arg0: memref<16x128xf32, #tpu.memory_space<vmem>>, %arg1: memref<128x128xf32, #tpu.memory_space<vmem>>, %arg2: memref<1x128xf32, #tpu.memory_space<vmem>>, %arg3: memref<1x128xf32, #tpu.memory_space<vmem>>, %arg4: memref<128x128xf32, #tpu.memory_space<vmem>>, %arg5: memref<1x128xf32, #tpu.memory_space<vmem>>, %arg6: memref<1x128xf32, #tpu.memory_space<vmem>>, %arg7: memref<16x128xf32, #tpu.memory_space<vmem>>) attributes {dimension_semantics = [], scalar_prefetch = 0 : i64, scratch_operands = 0 : i64, tpu.core_type = #tpu.core_type<tc>} {
    %c0 = arith.constant 0 : index
    %c0_0 = arith.constant 0 : index
    %0 = vector.load %arg0[%c0, %c0_0] : memref<16x128xf32, #tpu.memory_space<vmem>>, vector<16x128xf32>
    %c0_1 = arith.constant 0 : index
    %c0_2 = arith.constant 0 : index
    %1 = vector.load %arg1[%c0_1, %c0_2] : memref<128x128xf32, #tpu.memory_space<vmem>>, vector<128x128xf32>
    %cst = arith.constant dense<0.000000e+00> : vector<16x128xf32>
    %2 = tpu.matmul %0, %1, %cst {dimension_numbers = #tpu.dot_dimension_numbers<[1], [0], [0], [1], [0, 0, 1, 1], [], []>} : vector<16x128xf32>, vector<128x128xf32>, vector<16x128xf32> -> vector<16x128xf32>
    %cst_3 = arith.constant dense<0.000000e+00> : vector<128xf32>
    %3 = vector.multi_reduction <add>, %2, %cst_3 [0] : vector<16x128xf32> to vector<128xf32>
    %4 = vector.shape_cast %3 : vector<128xf32> to vector<1x128xf32>
    %cst_4 = arith.constant 6.250000e-02 : f32
    %5 = vector.broadcast %cst_4 : f32 to vector<1x128xf32>
    %6 = arith.mulf %4, %5 : vector<1x128xf32>
    %7 = arith.mulf %2, %2 : vector<16x128xf32>
    %cst_5 = arith.constant dense<0.000000e+00> : vector<128xf32>
    %8 = vector.multi_reduction <add>, %7, %cst_5 [0] : vector<16x128xf32> to vector<128xf32>
    %9 = vector.shape_cast %8 : vector<128xf32> to vector<1x128xf32>
    %cst_6 = arith.constant 6.250000e-02 : f32
    %10 = vector.broadcast %cst_6 : f32 to vector<1x128xf32>
    %11 = arith.mulf %9, %10 : vector<1x128xf32>
    %12 = arith.mulf %6, %6 : vector<1x128xf32>
    %13 = arith.subf %11, %12 : vector<1x128xf32>
    %cst_7 = arith.constant 0.000000e+00 : f32
    %14 = vector.broadcast %cst_7 : f32 to vector<1x128xf32>
    %15 = arith.maximumf %13, %14 : vector<1x128xf32>
    %c0_8 = arith.constant 0 : index
    %c0_9 = arith.constant 0 : index
    %16 = vector.load %arg2[%c0_8, %c0_9] : memref<1x128xf32, #tpu.memory_space<vmem>>, vector<1x128xf32>
    %cst_10 = arith.constant 9.99999974E-6 : f32
    %17 = vector.broadcast %cst_10 : f32 to vector<1x128xf32>
    %18 = arith.addf %15, %17 : vector<1x128xf32>
    %19 = math.rsqrt %18 : vector<1x128xf32>
    %20 = arith.mulf %16, %19 : vector<1x128xf32>
    %21 = vector.broadcast %6 : vector<1x128xf32> to vector<16x128xf32>
    %22 = arith.subf %2, %21 : vector<16x128xf32>
    %23 = vector.broadcast %20 : vector<1x128xf32> to vector<16x128xf32>
    %24 = arith.mulf %22, %23 : vector<16x128xf32>
    %c0_11 = arith.constant 0 : index
    %c0_12 = arith.constant 0 : index
    %25 = vector.load %arg3[%c0_11, %c0_12] : memref<1x128xf32, #tpu.memory_space<vmem>>, vector<1x128xf32>
    %26 = vector.broadcast %25 : vector<1x128xf32> to vector<16x128xf32>
    %27 = arith.addf %24, %26 : vector<16x128xf32>
    %cst_13 = arith.constant 0.000000e+00 : f32
    %28 = vector.broadcast %cst_13 : f32 to vector<16x128xf32>
    %29 = arith.maximumf %27, %28 : vector<16x128xf32>
    %30 = tpu.iota {dimensions = array<i32: 0>} : vector<16x1xi32>
    %c16_i32 = arith.constant 16 : i32
    %31 = vector.broadcast %c16_i32 : i32 to vector<16x1xi32>
    %32 = arith.cmpi slt, %30, %31 : vector<16x1xi32>
    %cst_14 = arith.constant 0.000000e+00 : f32
    %33 = vector.shape_cast %32 : vector<16x1xi1> to vector<16x1xi1>
    %34 = vector.broadcast %33 : vector<16x1xi1> to vector<16x128xi1>
    %35 = vector.broadcast %cst_14 : f32 to vector<16x128xf32>
    %36 = arith.select %34, %29, %35 : vector<16x128xi1>, vector<16x128xf32>
    %c0_15 = arith.constant 0 : index
    %c0_16 = arith.constant 0 : index
    %37 = vector.load %arg4[%c0_15, %c0_16] : memref<128x128xf32, #tpu.memory_space<vmem>>, vector<128x128xf32>
    %cst_17 = arith.constant dense<0.000000e+00> : vector<16x128xf32>
    %38 = tpu.matmul %36, %37, %cst_17 {dimension_numbers = #tpu.dot_dimension_numbers<[1], [0], [0], [1], [0, 0, 1, 1], [], []>} : vector<16x128xf32>, vector<128x128xf32>, vector<16x128xf32> -> vector<16x128xf32>
    %cst_18 = arith.constant dense<0.000000e+00> : vector<128xf32>
    %39 = vector.multi_reduction <add>, %38, %cst_18 [0] : vector<16x128xf32> to vector<128xf32>
    %40 = vector.shape_cast %39 : vector<128xf32> to vector<1x128xf32>
    %cst_19 = arith.constant 6.250000e-02 : f32
    %41 = vector.broadcast %cst_19 : f32 to vector<1x128xf32>
    %42 = arith.mulf %40, %41 : vector<1x128xf32>
    %43 = arith.mulf %38, %38 : vector<16x128xf32>
    %cst_20 = arith.constant dense<0.000000e+00> : vector<128xf32>
    %44 = vector.multi_reduction <add>, %43, %cst_20 [0] : vector<16x128xf32> to vector<128xf32>
    %45 = vector.shape_cast %44 : vector<128xf32> to vector<1x128xf32>
    %cst_21 = arith.constant 6.250000e-02 : f32
    %46 = vector.broadcast %cst_21 : f32 to vector<1x128xf32>
    %47 = arith.mulf %45, %46 : vector<1x128xf32>
    %48 = arith.mulf %42, %42 : vector<1x128xf32>
    %49 = arith.subf %47, %48 : vector<1x128xf32>
    %cst_22 = arith.constant 0.000000e+00 : f32
    %50 = vector.broadcast %cst_22 : f32 to vector<1x128xf32>
    %51 = arith.maximumf %49, %50 : vector<1x128xf32>
    %c0_23 = arith.constant 0 : index
    %c0_24 = arith.constant 0 : index
    %52 = vector.load %arg5[%c0_23, %c0_24] : memref<1x128xf32, #tpu.memory_space<vmem>>, vector<1x128xf32>
    %cst_25 = arith.constant 9.99999974E-6 : f32
    %53 = vector.broadcast %cst_25 : f32 to vector<1x128xf32>
    %54 = arith.addf %51, %53 : vector<1x128xf32>
    %55 = math.rsqrt %54 : vector<1x128xf32>
    %56 = arith.mulf %52, %55 : vector<1x128xf32>
    %57 = vector.broadcast %42 : vector<1x128xf32> to vector<16x128xf32>
    %58 = arith.subf %38, %57 : vector<16x128xf32>
    %59 = vector.broadcast %56 : vector<1x128xf32> to vector<16x128xf32>
    %60 = arith.mulf %58, %59 : vector<16x128xf32>
    %c0_26 = arith.constant 0 : index
    %c0_27 = arith.constant 0 : index
    %61 = vector.load %arg6[%c0_26, %c0_27] : memref<1x128xf32, #tpu.memory_space<vmem>>, vector<1x128xf32>
    %62 = vector.broadcast %61 : vector<1x128xf32> to vector<16x128xf32>
    %63 = arith.addf %60, %62 : vector<16x128xf32>
    %cst_28 = arith.constant 0.000000e+00 : f32
    %64 = vector.broadcast %cst_28 : f32 to vector<16x128xf32>
    %65 = arith.maximumf %63, %64 : vector<16x128xf32>
    %c0_29 = arith.constant 0 : index
    %c0_30 = arith.constant 0 : index
    %66 = vector.load %arg7[%c0_29, %c0_30] : memref<16x128xf32, #tpu.memory_space<vmem>>, vector<16x128xf32>
    tpu.vector_store %arg7[%c0_29, %c0_30], %65 {strides = array<i32>} : memref<16x128xf32, #tpu.memory_space<vmem>>, vector<16x128xf32>,
    return
  }
}

</mosaic_0001>

<llo_original>
// kernel: tpu_custom_call.1
$region0: #{tpu_custom_call.1}
  #allocation0 [shape = 'u32[]', space=smem, size = 0x4, offset = 0x4, fixed_abs, tag = 'smem constant byte address 0x4 - core index']
  #allocation1 [shape = 'u32[144,128]{1,0:T(1,128)}', space=vmem, size = 0x12000, scoped, tag = 'internal scratch']
  %s0 = inlined_call_operand.hbm [shape: f32[16,128], index: 0, kind: input, shape index: {}]
  %s1 = inlined_call_operand.hbm [shape: f32[128,128], index: 1, kind: input, shape index: {}]
  %s2 = inlined_call_operand.vmem [shape: f32[1,128], index: 2, kind: input, shape index: {}]
  %s3 = inlined_call_operand.vmem [shape: f32[1,128], index: 3, kind: input, shape index: {}]
  %s4 = inlined_call_operand.hbm [shape: f32[128,128], index: 4, kind: input, shape index: {}]
  %s5 = inlined_call_operand.vmem [shape: f32[1,128], index: 5, kind: input, shape index: {}]
  %s6 = inlined_call_operand.vmem [shape: f32[1,128], index: 6, kind: input, shape index: {}]
  %s7 = inlined_call_operand.hbm [shape: f32[16,128], index: 7, kind: output, shape index: {}]
  %s8 = sld [smem:[#allocation0]]
  $region50: #{tpu_custom_call.1} parent=0
    _
  %s10 = ssub.s32 1, %s8
  %s11 = scalar_select 0, %s10, %s8
  $region1: #{tpu_custom_call.1} parent=0
    #allocation2 [shape = 'u8[8192]{0}', space=vmem, size = 0x2000, scoped, tag = 'input window, operand 0, single buffered']
    #allocation3 [shape = 's32[1]{0}', space=sflag, size = 0x4, scoped, tag = 'scoped memory for tpu_custom_call.1']
    #allocation4 [shape = 's32[1]{0}', space=sflag, size = 0x4, scoped, tag = 'scoped memory for tpu_custom_call.1']
    #allocation5 [shape = 'u8[65536]{0}', space=vmem, size = 0x10000, scoped, tag = 'input window, operand 1, single buffered']
    #allocation6 [shape = 's32[1]{0}', space=sflag, size = 0x4, scoped, tag = 'scoped memory for tpu_custom_call.1']
    #allocation7 [shape = 'u8[65536]{0}', space=vmem, size = 0x10000, scoped, tag = 'input window, operand 4, single buffered']
    #allocation8 [shape = 'u8[8192]{0}', space=vmem, size = 0x2000, scoped, tag = 'output window, operand 0, single buffered']
    %12 = vsyncpa [#allocation3], 0
    %13 = vsyncpa [#allocation6], 0
    %14 = vsyncpa [#allocation4], 0
    // Predicated region
    $region2: #{tpu_custom_call.1} parent=1 // pred_check
      _
    $region3: #{tpu_custom_call.1} parent=1 // pred_check_branch
      %16 = sbr.rel (0) target = $region5
    $region4: #{tpu_custom_call.1} parent=1 // pred_region
      %s18 = ssub.s32 256, 256
      %19 = vsyncadd [#allocation3], %s18
      %s20 = sshll.u32 [#allocation2], 4
      %s21 = int_to_ptr.vmem [resolvable:$true] %s20
      %26 = dma.hbm_to_vmem [thread:$0]  %s0, 256, %s21, [#allocation3], 128, 128, 8
    $region5: #{tpu_custom_call.1} parent=1 // pred_fallthru
      _
    // Predicated region
    $region6: #{tpu_custom_call.1} parent=1 // pred_check
      _
    $region7: #{tpu_custom_call.1} parent=1 // pred_check_branch
      %28 = sbr.rel (0) target = $region9
    $region8: #{tpu_custom_call.1} parent=1 // pred_region
      %s30 = ssub.s32 2048, 2048
      %31 = vsyncadd [#allocation6], %s30
      %s32 = sshll.u32 [#allocation5], 4
      %s33 = int_to_ptr.vmem [resolvable:$true] %s32
      %38 = dma.hbm_to_vmem [thread:$0]  %s1, 2048, %s33, [#allocation6], 128, 128, 8
    $region9: #{tpu_custom_call.1} parent=1 // pred_fallthru
      _
    // Predicated region
    $region10: #{tpu_custom_call.1} parent=1 // pred_check
      _
    $region11: #{tpu_custom_call.1} parent=1 // pred_check_branch
      %40 = sbr.rel (0) target = $region13
    $region12: #{tpu_custom_call.1} parent=1 // pred_region
      _
    $region13: #{tpu_custom_call.1} parent=1 // pred_fallthru
      _
    // Predicated region
    $region14: #{tpu_custom_call.1} parent=1 // pred_check
      _
    $region15: #{tpu_custom_call.1} parent=1 // pred_check_branch
      %42 = sbr.rel (0) target = $region17
    $region16: #{tpu_custom_call.1} parent=1 // pred_region
      _
    $region17: #{tpu_custom_call.1} parent=1 // pred_fallthru
      _
    // Predicated region
    $region18: #{tpu_custom_call.1} parent=1 // pred_check
      _
    $region19: #{tpu_custom_call.1} parent=1 // pred_check_branch
      %44 = sbr.rel (0) target = $region21
    $region20: #{tpu_custom_call.1} parent=1 // pred_region
      %s46 = ssub.s32 2048, 2048
      %47 = vsyncadd [#allocation6], %s46
      %s48 = sshll.u32 [#allocation7], 4
      %s49 = int_to_ptr.vmem [resolvable:$true] %s48
      %54 = dma.hbm_to_vmem [thread:$0]  %s4, 2048, %s49, [#allocation6], 128, 128, 8
    $region21: #{tpu_custom_call.1} parent=1 // pred_fallthru
      _
    // Predicated region
    $region22: #{tpu_custom_call.1} parent=1 // pred_check
      _
    $region23: #{tpu_custom_call.1} parent=1 // pred_check_branch
      %56 = sbr.rel (0) target = $region25
    $region24: #{tpu_custom_call.1} parent=1 // pred_region
      _
    $region25: #{tpu_custom_call.1} parent=1 // pred_fallthru
      _
    // Predicated region
    $region26: #{tpu_custom_call.1} parent=1 // pred_check
      _
    $region27: #{tpu_custom_call.1} parent=1 // pred_check_branch
      %58 = sbr.rel (0) target = $region29
    $region28: #{tpu_custom_call.1} parent=1 // pred_region
      _
    $region29: #{tpu_custom_call.1} parent=1 // pred_fallthru
      _
    // Predicated region
    $region30: #{tpu_custom_call.1} parent=1 // pred_check
      _
    $region31: #{tpu_custom_call.1} parent=1 // pred_check_branch
      %60 = sbr.rel (0) target = $region33
    $region32: #{tpu_custom_call.1} parent=1 // pred_region
      %61 = dma.done [#allocation3], 256
    $region33: #{tpu_custom_call.1} parent=1 // pred_fallthru
      _
    // Predicated region
    $region34: #{tpu_custom_call.1} parent=1 // pred_check
      _
    $region35: #{tpu_custom_call.1} parent=1 // pred_check_branch
      %63 = sbr.rel (0) target = $region37
    $region36: #{tpu_custom_call.1} parent=1 // pred_region
      %64 = dma.done [#allocation6], 2048
    $region37: #{tpu_custom_call.1} parent=1 // pred_fallthru
      _
    // Predicated region
    $region38: #{tpu_custom_call.1} parent=1 // pred_check
      _
    $region39: #{tpu_custom_call.1} parent=1 // pred_check_branch
      %66 = sbr.rel (0) target = $region41
    $region40: #{tpu_custom_call.1} parent=1 // pred_region
      %67 = dma.done [#allocation6], 2048
    $region41: #{tpu_custom_call.1} parent=1 // pred_fallthru
      _
    %v68 = vld [vmem:[#allocation2] sm:$0xff]
    %v69 = vld [vmem:[#allocation2 + $0x8] sm:$0xff]
    %v70 = vld [vmem:[#allocation5] sm:$0xff]
    %v71 = vld [vmem:[#allocation5 + $0x8] sm:$0xff]
    %v72 = vld [vmem:[#allocation5 + $0x10] sm:$0xff]
    %v73 = vld [vmem:[#allocation5 + $0x18] sm:$0xff]
    %v74 = vld [vmem:[#allocation5 + $0x20] sm:$0xff]
    %v75 = vld [vmem:[#allocation5 + $0x28] sm:$0xff]
    %v76 = vld [vmem:[#allocation5 + $0x30] sm:$0xff]
    %v77 = vld [vmem:[#allocation5 + $0x38] sm:$0xff]
    %v78 = vld [vmem:[#allocation5 + $0x40] sm:$0xff]
    %v79 = vld [vmem:[#allocation5 + $0x48] sm:$0xff]
    %v80 = vld [vmem:[#allocation5 + $0x50] sm:$0xff]
    %v81 = vld [vmem:[#allocation5 + $0x58] sm:$0xff]
    %v82 = vld [vmem:[#allocation5 + $0x60] sm:$0xff]
    %v83 = vld [vmem:[#allocation5 + $0x68] sm:$0xff]
    %v84 = vld [vmem:[#allocation5 + $0x70] sm:$0xff]
    %v85 = vld [vmem:[#allocation5 + $0x78] sm:$0xff]
    %86 = vmatprep.subr.mxu0 0.0
    %87 = vmatpush1.msra.mxu0 %v70
    %88 = vmatprep.subr.mxu0 0.0
    %89 = vmatpush1.msra.mxu0 %v71
    %90 = vmatprep.subr.mxu0 0.0
    %91 = vmatpush1.msra.mxu0 %v72
    %92 = vmatprep.subr.mxu0 0.0
    %93 = vmatpush1.msra.mxu0 %v73
    %94 = vmatprep.subr.mxu0 0.0
    %95 = vmatpush1.msra.mxu0 %v74
    %96 = vmatprep.subr.mxu0 0.0
    %97 = vmatpush1.msra.mxu0 %v75
    %98 = vmatprep.subr.mxu0 0.0
    %99 = vmatpush1.msra.mxu0 %v76
    %100 = vmatprep.subr.mxu0 0.0
    %101 = vmatpush1.msra.mxu0 %v77
    %102 = vmatprep.subr.mxu0 0.0
    %103 = vmatpush1.msra.mxu0 %v78
    %104 = vmatprep.subr.mxu0 0.0
    %105 = vmatpush1.msra.mxu0 %v79
    %106 = vmatprep.subr.mxu0 0.0
    %107 = vmatpush1.msra.mxu0 %v80
    %108 = vmatprep.subr.mxu0 0.0
    %109 = vmatpush1.msra.mxu0 %v81
    %110 = vmatprep.subr.mxu0 0.0
    %111 = vmatpush1.msra.mxu0 %v82
    %112 = vmatprep.subr.mxu0 0.0
    %113 = vmatpush1.msra.mxu0 %v83
    %114 = vmatprep.subr.mxu0 0.0
    %115 = vmatpush1.msra.mxu0 %v84
    %116 = vmatprep.subr.mxu0 0.0
    %117 = vmatpush1.msra.mxu0 %v85
    %118 = vmatprep.subr.mxu0 0.0
    %119 = vmatpush1.msra.mxu0 0.0
    %120 = vmatprep.subr.mxu0 0.0
    %121 = vmatpush1.msra.mxu0 0.0
    %122 = vmatprep.subr.mxu0 0.0
    %123 = vmatpush1.msra.mxu0 0.0
    %124 = vmatprep.subr.mxu0 0.0
    %125 = vmatpush1.msra.mxu0 0.0
    %126 = vmatprep.subr.mxu0 0.0
    %127 = vmatpush1.msra.mxu0 0.0
    %128 = vmatprep.subr.mxu0 0.0
    %129 = vmatpush1.msra.mxu0 0.0
    %130 = vmatprep.subr.mxu0 0.0
    %131 = vmatpush1.msra.mxu0 0.0
    %132 = vmatprep.subr.mxu0 0.0
    %133 = vmatpush1.msra.mxu0 0.0
    %134 = vmatprep.subr.mxu0 0.0
    %135 = vmatpush1.msra.mxu0 0.0
    %136 = vmatprep.subr.mxu0 0.0
    %137 = vmatpush1.msra.mxu0 0.0
    %138 = vmatprep.subr.mxu0 0.0
    %139 = vmatpush1.msra.mxu0 0.0
    %140 = vmatprep.subr.mxu0 0.0
    %141 = vmatpush1.msra.mxu0 0.0
    %142 = vmatprep.subr.mxu0 0.0
    %143 = vmatpush1.msra.mxu0 0.0
    %144 = vmatprep.subr.mxu0 0.0
    %145 = vmatpush1.msra.mxu0 0.0
    %146 = vmatprep.subr.mxu0 0.0
    %147 = vmatpush1.msra.mxu0 0.0
    %148 = vmatprep.subr.mxu0 0.0
    %149 = vmatpush1.msra.mxu0 0.0
    %150 = vmatprep.mubr.f32.mxu0 0.0
    %151 = vmatmul.mubr.f32.gmra.mrb[0].mxu0 %v68
    %v152 = vpop.f32.mrb[0].mxu0
    %v153 = vadd.f32 0.0, %v152
    %v154 = vpop.f32.mrb[0].mxu0
    %155 = vmatprep.mubr.f32.mxu0 0.0
    %156 = vmatmul.mubr.f32.gmra.mrb[0].mxu0 %v69
    %v157 = vpop.f32.mrb[0].mxu0
    %v158 = vadd.f32 0.0, %v157
    %v159 = vpop.f32.mrb[0].mxu0
    %160 = vdwg.mxu0
    %v161 = vadd.f32 %v153, %v158
    %v162 = vrot.slane %v161, 4
    %v163 = vadd.f32 %v161, %v162
    %v164 = vrot.slane %v163, 2
    %v165 = vadd.f32 %v163, %v164
    %v166 = vrot.slane %v165, 1
    %v167 = vadd.f32 %v165, %v166
    %v168 = vmul.f32 %v167, 0.0625
    %v169 = vmul.f32 %v153, %v153
    %v170 = vmul.f32 %v158, %v158
    %v171 = vadd.f32 %v169, %v170
    %v172 = vrot.slane %v171, 4
    %v173 = vadd.f32 %v171, %v172
    %v174 = vrot.slane %v173, 2
    %v175 = vadd.f32 %v173, %v174
    %v176 = vrot.slane %v175, 1
    %v177 = vadd.f32 %v175, %v176
    %v178 = vmul.f32 %v177, 0.0625
    %v179 = vmul.f32 %v168, %v168
    %v180 = vsub.f32 %v178, %v179
    %v181 = vmax.f32 %v180, 0.0
    %v182 = vld [vmem:[%s2] sm:$0x1]
    %v183 = vadd.f32 %v181, 1e-05
    %v184 = vrsqrt.pop %v183
    %v185 = vmul.f32 %v182, %v184
    %v186 = vsub.f32 %v153, %v168
    %v187 = vsub.f32 %v158, %v168
    %v189 = vlaneseq
    %v190 = vshrl.u32 %v189, 7
    %v191 = vsub.s32 0, %v190
    %v192 = vrot.slane %v185, %v191
    %v194 = vmul.f32 %v186, %v192
    %v195 = vmul.f32 %v187, %v192
    %v196 = vld [vmem:[%s3] sm:$0x1]
    %v198 = vlaneseq
    %v199 = vshrl.u32 %v198, 7
    %v200 = vsub.s32 0, %v199
    %v201 = vrot.slane %v196, %v200
    %v203 = vadd.f32 %v194, %v201
    %v204 = vadd.f32 %v195, %v201
    %v205 = vmax.f32 %v203, 0.0
    %v206 = vmax.f32 %v204, 0.0
    %v207 = vlaneseq
    %v208 = vshrl.u32 %v207, 7
    %v209 = vadd.s32 %v208, 8
    %vm210 = vcmp.lt.s32.totalorder %v208, 16
    %vm211 = vcmp.lt.s32.totalorder %v209, 16
    %v212 = vsel %vm210, 1, 0
    %v213 = vsel %vm211, 1, 0
    %vm214 = vcmp.eq.s32.totalorder %v212, 1
    %vm215 = vcmp.eq.s32.totalorder %v213, 1
    %v216 = vsel %vm214, %v205, 0.0
    %v217 = vsel %vm215, %v206, 0.0
    %v218 = vld [vmem:[#allocation7] sm:$0xff]
    %v219 = vld [vmem:[#allocation7 + $0x8] sm:$0xff]
    %v220 = vld [vmem:[#allocation7 + $0x10] sm:$0xff]
    %v221 = vld [vmem:[#allocation7 + $0x18] sm:$0xff]
    %v222 = vld [vmem:[#allocation7 + $0x20] sm:$0xff]
    %v223 = vld [vmem:[#allocation7 + $0x28] sm:$0xff]
    %v224 = vld [vmem:[#allocation7 + $0x30] sm:$0xff]
    %v225 = vld [vmem:[#allocation7 + $0x38] sm:$0xff]
    %v226 = vld [vmem:[#allocation7 + $0x40] sm:$0xff]
    %v227 = vld [vmem:[#allocation7 + $0x48] sm:$0xff]
    %v228 = vld [vmem:[#allocation7 + $0x50] sm:$0xff]
    %v229 = vld [vmem:[#allocation7 + $0x58] sm:$0xff]
    %v230 = vld [vmem:[#allocation7 + $0x60] sm:$0xff]
    %v231 = vld [vmem:[#allocation7 + $0x68] sm:$0xff]
    %v232 = vld [vmem:[#allocation7 + $0x70] sm:$0xff]
    %v233 = vld [vmem:[#allocation7 + $0x78] sm:$0xff]
    %234 = vmatprep.subr.mxu0 0.0
    %235 = vmatpush1.msra.mxu0 %v218
    %236 = vmatprep.subr.mxu0 0.0
    %237 = vmatpush1.msra.mxu0 %v219
    %238 = vmatprep.subr.mxu0 0.0
    %239 = vmatpush1.msra.mxu0 %v220
    %240 = vmatprep.subr.mxu0 0.0
    %241 = vmatpush1.msra.mxu0 %v221
    %242 = vmatprep.subr.mxu0 0.0
    %243 = vmatpush1.msra.mxu0 %v222
    %244 = vmatprep.subr.mxu0 0.0
    %245 = vmatpush1.msra.mxu0 %v223
    %246 = vmatprep.subr.mxu0 0.0
    %247 = vmatpush1.msra.mxu0 %v224
    %248 = vmatprep.subr.mxu0 0.0
    %249 = vmatpush1.msra.mxu0 %v225
    %250 = vmatprep.subr.mxu0 0.0
    %251 = vmatpush1.msra.mxu0 %v226
    %252 = vmatprep.subr.mxu0 0.0
    %253 = vmatpush1.msra.mxu0 %v227
    %254 = vmatprep.subr.mxu0 0.0
    %255 = vmatpush1.msra.mxu0 %v228
    %256 = vmatprep.subr.mxu0 0.0
    %257 = vmatpush1.msra.mxu0 %v229
    %258 = vmatprep.subr.mxu0 0.0
    %259 = vmatpush1.msra.mxu0 %v230
    %260 = vmatprep.subr.mxu0 0.0
    %261 = vmatpush1.msra.mxu0 %v231
    %262 = vmatprep.subr.mxu0 0.0
    %263 = vmatpush1.msra.mxu0 %v232
    %264 = vmatprep.subr.mxu0 0.0
    %265 = vmatpush1.msra.mxu0 %v233
    %266 = vmatprep.subr.mxu0 0.0
    %267 = vmatpush1.msra.mxu0 0.0
    %268 = vmatprep.subr.mxu0 0.0
    %269 = vmatpush1.msra.mxu0 0.0
    %270 = vmatprep.subr.mxu0 0.0
    %271 = vmatpush1.msra.mxu0 0.0
    %272 = vmatprep.subr.mxu0 0.0
    %273 = vmatpush1.msra.mxu0 0.0
    %274 = vmatprep.subr.mxu0 0.0
    %275 = vmatpush1.msra.mxu0 0.0
    %276 = vmatprep.subr.mxu0 0.0
    %277 = vmatpush1.msra.mxu0 0.0
    %278 = vmatprep.subr.mxu0 0.0
    %279 = vmatpush1.msra.mxu0 0.0
    %280 = vmatprep.subr.mxu0 0.0
    %281 = vmatpush1.msra.mxu0 0.0
    %282 = vmatprep.subr.mxu0 0.0
    %283 = vmatpush1.msra.mxu0 0.0
    %284 = vmatprep.subr.mxu0 0.0
    %285 = vmatpush1.msra.mxu0 0.0
    %286 = vmatprep.subr.mxu0 0.0
    %287 = vmatpush1.msra.mxu0 0.0
    %288 = vmatprep.subr.mxu0 0.0
    %289 = vmatpush1.msra.mxu0 0.0
    %290 = vmatprep.subr.mxu0 0.0
    %291 = vmatpush1.msra.mxu0 0.0
    %292 = vmatprep.subr.mxu0 0.0
    %293 = vmatpush1.msra.mxu0 0.0
    %294 = vmatprep.subr.mxu0 0.0
    %295 = vmatpush1.msra.mxu0 0.0
    %296 = vmatprep.subr.mxu0 0.0
    %297 = vmatpush1.msra.mxu0 0.0
    %298 = vmatprep.mubr.f32.mxu0 0.0
    %299 = vmatmul.mubr.f32.gmra.mrb[0].mxu0 %v216
    %v300 = vpop.f32.mrb[0].mxu0
    %v301 = vadd.f32 0.0, %v300
    %v302 = vpop.f32.mrb[0].mxu0
    %303 = vmatprep.mubr.f32.mxu0 0.0
    %304 = vmatmul.mubr.f32.gmra.mrb[0].mxu0 %v217
    %v305 = vpop.f32.mrb[0].mxu0
    %v306 = vadd.f32 0.0, %v305
    %v307 = vpop.f32.mrb[0].mxu0
    %308 = vdwg.mxu0
    %v309 = vadd.f32 %v301, %v306
    %v310 = vrot.slane %v309, 4
    %v311 = vadd.f32 %v309, %v310
    %v312 = vrot.slane %v311, 2
    %v313 = vadd.f32 %v311, %v312
    %v314 = vrot.slane %v313, 1
    %v315 = vadd.f32 %v313, %v314
    %v316 = vmul.f32 %v315, 0.0625
    %v317 = vmul.f32 %v301, %v301
    %v318 = vmul.f32 %v306, %v306
    %v319 = vadd.f32 %v317, %v318
    %v320 = vrot.slane %v319, 4
    %v321 = vadd.f32 %v319, %v320
    %v322 = vrot.slane %v321, 2
    %v323 = vadd.f32 %v321, %v322
    %v324 = vrot.slane %v323, 1
    %v325 = vadd.f32 %v323, %v324
    %v326 = vmul.f32 %v325, 0.0625
    %v327 = vmul.f32 %v316, %v316
    %v328 = vsub.f32 %v326, %v327
    %v329 = vmax.f32 %v328, 0.0
    %v330 = vld [vmem:[%s5] sm:$0x1]
    %v331 = vadd.f32 %v329, 1e-05
    %v332 = vrsqrt.pop %v331
    %v333 = vmul.f32 %v330, %v332
    %v334 = vsub.f32 %v301, %v316
    %v335 = vsub.f32 %v306, %v316
    %v337 = vlaneseq
    %v338 = vshrl.u32 %v337, 7
    %v339 = vsub.s32 0, %v338
    %v340 = vrot.slane %v333, %v339
    %v342 = vmul.f32 %v334, %v340
    %v343 = vmul.f32 %v335, %v340
    %v344 = vld [vmem:[%s6] sm:$0x1]
    %v346 = vlaneseq
    %v347 = vshrl.u32 %v346, 7
    %v348 = vsub.s32 0, %v347
    %v349 = vrot.slane %v344, %v348
    %v351 = vadd.f32 %v342, %v349
    %v352 = vadd.f32 %v343, %v349
    %v353 = vmax.f32 %v351, 0.0
    %v354 = vmax.f32 %v352, 0.0
    %355 = vst [vmem:[#allocation8] sm:$0xff] %v353
    %356 = vst [vmem:[#allocation8 + $0x8] sm:$0xff] %v354
    // Predicated region
    $region42: #{tpu_custom_call.1} parent=1 // pred_check
      _
    $region43: #{tpu_custom_call.1} parent=1 // pred_check_branch
      %358 = sbr.rel (0) target = $region45
    $region44: #{tpu_custom_call.1} parent=1 // pred_region
      %s360 = ssub.s32 256, 256
      %361 = vsyncadd [#allocation4], %s360
      %s362 = sshll.u32 [#allocation8], 4
      %s363 = int_to_ptr.vmem [resolvable:$true] %s362
      %368 = dma.vmem_to_hbm [thread:$0]  %s363, 256, %s7, [#allocation4], 128, 128, 8
    $region45: #{tpu_custom_call.1} parent=1 // pred_fallthru
      _
    // Predicated region
    $region46: #{tpu_custom_call.1} parent=1 // pred_check
      _
    $region47: #{tpu_custom_call.1} parent=1 // pred_check_branch
      %370 = sbr.rel (0) target = $region49
    $region48: #{tpu_custom_call.1} parent=1 // pred_region
      %371 = dma.done [#allocation4], 256
    $region49: #{tpu_custom_call.1} parent=1 // pred_fallthru
      _
    %372 = vsyncpa [#allocation3], 1
    %373 = vsyncpa [#allocation6], 1
    %374 = vsyncpa [#allocation4], 1

</llo_original>
